<compile_context>
chip_gen: v7x
topology: tpu7x:2x2x1
jax: 0.10.0
libtpu: 0.0.40
codegen_flags: <defaults>
</compile_context>

<pallas_src>
import functools
import math

import jax
import jax.numpy as jnp
from jax.experimental import pallas as pl
from jax.experimental.pallas import tpu as pltpu

BN_EPS = 1e-5


# ----------------------------------------------------------------------------
# im2col for a 3x3 / stride-1 / pad-1 conv on the flattened-spatial layout.
#   v: (N, C, H*W)  ->  (N, 9*C, H*W)
# Row k = (3*dy + dx)*C + c holds, at lane l = h*W + w, the value
# v[n, c, (h+dy-1)*W + (w+dx-1)]  (0 when the source pixel falls in the zero
# padding).  Shifts along the lane axis are static slices with zero fill; a
# per-dx column mask removes row-wrap artifacts.
# ----------------------------------------------------------------------------
def _im2col_3x3(v, H, W):
    N, C, HW = v.shape
    lane = jax.lax.broadcasted_iota(jnp.int32, (1, 1, HW), 2)
    col = lane % W
    col_valid = {dx: (col + (dx - 1) >= 0) & (col + (dx - 1) < W)
                 for dx in range(3)}

    taps = []
    for dy in range(3):
        for dx in range(3):
            s = (dy - 1) * W + (dx - 1)          # flat source offset
            if s > 0:
                shifted = jnp.concatenate(
                    [v[:, :, s:], jnp.zeros((N, C, s), v.dtype)], axis=-1)
            elif s < 0:
                shifted = jnp.concatenate(
                    [jnp.zeros((N, C, -s), v.dtype), v[:, :, :HW + s]], axis=-1)
            else:
                shifted = v
            taps.append(jnp.where(col_valid[dx], shifted, 0.0))
    return jnp.concatenate(taps, axis=1)         # (N, 9*C, H*W)


# ----------------------------------------------------------------------------
# Fused kernel: conv1 -> bn1 -> relu -> conv2 -> bn2 -> add residual -> relu.
# Single invocation (no grid); the whole working set fits comfortably in VMEM
# at these shapes, which keeps BatchNorm statistics global over (N, H, W).
# ----------------------------------------------------------------------------
def _basic_block_kernel(x_ref, w1_ref, w2_ref, g1_ref, b1_ref, g2_ref, b2_ref,
                        o_ref, *, H, W, compute_dtype):
    N = x_ref.shape[0]
    x = x_ref[...].astype(jnp.float32)                         # (N, C, H*W)

    def conv3x3(v, w_ref):
        # One im2col matmul per batch element with K = 9*Cin; lane-dense
        # (H*W on lanes) output; accumulation stays in registers (no scratch).
        patches = _im2col_3x3(v, H, W).astype(compute_dtype)   # (N, 9*C, HW)
        w = w_ref[...].astype(compute_dtype)                   # (Cout, 9*C)
        outs = [jnp.dot(w, patches[n], preferred_element_type=jnp.float32)
                for n in range(N)]                             # (Cout, HW)
        return jnp.stack(outs, axis=0)                         # (N, Cout, HW)

    def batch_norm(v, g_ref, b_ref):
        # training-mode BatchNorm2d: biased batch stats over (N, H, W), f32.
        mean = jnp.mean(v, axis=(0, 2), keepdims=True)
        var = jnp.mean(jnp.square(v - mean), axis=(0, 2), keepdims=True)
        return (v - mean) * jax.lax.rsqrt(var + BN_EPS) * g_ref[...] + b_ref[...]

    out = jnp.maximum(batch_norm(conv3x3(x, w1_ref), g1_ref, b1_ref), 0.0)
    out = batch_norm(conv3x3(out, w2_ref), g2_ref, b2_ref) + x   # residual
    o_ref[...] = jnp.maximum(out, 0.0).astype(o_ref.dtype)       # lane-dense


# ----------------------------------------------------------------------------
# Wrapper: NCHW in, NCHW out.  All boundary layout changes are free reshapes.
# ----------------------------------------------------------------------------
@functools.partial(jax.jit, static_argnames=("compute_dtype",))
def basic_block_forward(x_nchw, params, *, compute_dtype=jnp.bfloat16):
    """BasicBlock.forward(x) for stride=1, downsample=None.  x is NCHW."""
    N, C, H, W = x_nchw.shape
    P = params["conv1_w"].shape[0]
    if P != C:
        raise ValueError("stride=1 / downsample=None requires inplanes == planes")

    # (Cout, Cin, 3, 3) -> (Cout, 9*Cin) with k = (3*dy+dx)*Cin + cin, matching
    # the row order produced by _im2col_3x3.  Tiny tensors, done once by XLA.
    def pack_w(w):
        return jnp.transpose(w, (0, 2, 3, 1)).reshape(w.shape[0], -1)

    kernel = functools.partial(_basic_block_kernel, H=H, W=W,
                               compute_dtype=compute_dtype)
    out_flat = pl.pallas_call(
        kernel,
        out_shape=jax.ShapeDtypeStruct((N, P, H * W), x_nchw.dtype),
        compiler_params=pltpu.CompilerParams(
            vmem_limit_bytes=32 * 1024 * 1024),
    )(
        x_nchw.reshape(N, C, H * W),             # free reshape, no HBM pad
        pack_w(params["conv1_w"]),
        pack_w(params["conv2_w"]),
        params["bn1_gamma"].reshape(1, P, 1),
        params["bn1_beta"].reshape(1, P, 1),
        params["bn2_gamma"].reshape(1, P, 1),
        params["bn2_beta"].reshape(1, P, 1),
    )
    return out_flat.reshape(N, P, H, W)          # free reshape back to NCHW


# ----------------------------------------------------------------------------
# Parameter init (PyTorch-like conv init; non-trivial BN affine for testing).
# ----------------------------------------------------------------------------
def init_basic_block_params(key, inplanes, planes):
    k1, k2, k3, k4, k5, k6 = jax.random.split(key, 6)
    b1 = 1.0 / math.sqrt(inplanes * 9)
    b2 = 1.0 / math.sqrt(planes * 9)
    return {
        "conv1_w": jax.random.uniform(k1, (planes, inplanes, 3, 3),
                                      jnp.float32, -b1, b1),
        "bn1_gamma": jax.random.uniform(k3, (planes,), jnp.float32, 0.8, 1.2),
        "bn1_beta": jax.random.uniform(k4, (planes,), jnp.float32, -0.1, 0.1),
        "conv2_w": jax.random.uniform(k2, (planes, planes, 3, 3),
                                      jnp.float32, -b2, b2),
        "bn2_gamma": jax.random.uniform(k5, (planes,), jnp.float32, 0.8, 1.2),
        "bn2_beta": jax.random.uniform(k6, (planes,), jnp.float32, -0.1, 0.1),
    }


# ----------------------------------------------------------------------------
# Pure-JAX reference (NCHW, f32) for correctness checking.
# ----------------------------------------------------------------------------
def _reference_forward(x, params):
    def conv(v, w):
        return jax.lax.conv_general_dilated(
            v, w, window_strides=(1, 1), padding=((1, 1), (1, 1)),
            dimension_numbers=("NCHW", "OIHW", "NCHW"))

    def bn(v, g, b):
        mean = jnp.mean(v, axis=(0, 2, 3), keepdims=True)
        var = jnp.mean(jnp.square(v - mean), axis=(0, 2, 3), keepdims=True)
        y = (v - mean) * jax.lax.rsqrt(var + BN_EPS)
        return y * g.reshape(1, -1, 1, 1) + b.reshape(1, -1, 1, 1)

    out = jax.nn.relu(bn(conv(x, params["conv1_w"]),
                         params["bn1_gamma"], params["bn1_beta"]))
    out = bn(conv(out, params["conv2_w"]),
             params["bn2_gamma"], params["bn2_beta"])
    return jax.nn.relu(out + x)


if __name__ == "__main__":
    key = jax.random.PRNGKey(0)
    k_x, k_p = jax.random.split(key)

    inplanes = planes = 4
    x = jax.random.normal(k_x, (2, inplanes, 16, 16), jnp.float32)   # NCHW
    params = init_basic_block_params(k_p, inplanes, planes)

    ref = _reference_forward(x, params)

    # Exact-semantics path (f32 MXU inputs) -> tight tolerance.
    out_f32 = jax.block_until_ready(
        basic_block_forward(x, params, compute_dtype=jnp.float32))
    assert out_f32.shape == ref.shape == (2, planes, 16, 16)
    assert jnp.allclose(out_f32, ref, atol=1e-4, rtol=1e-4), (
        f"f32 max abs err = {float(jnp.max(jnp.abs(out_f32 - ref)))}")

    # Default fast path (bf16 MXU inputs, f32 accumulate) -> bf16 tolerance.
    out_bf16 = jax.block_until_ready(basic_block_forward(x, params))
    assert jnp.allclose(out_bf16, ref, atol=5e-2, rtol=5e-2), (
        f"bf16 max abs err = {float(jnp.max(jnp.abs(out_bf16 - ref)))}")

    print("KERNEL_OK")
</pallas_src>

<mosaic_0001>
module attributes {stable_mosaic.version = 11 : i64} {
  func.func @_basic_block_kernel(%arg0: memref<2x4x256xf32, #tpu.memory_space<vmem>>, %arg1: memref<4x36xf32, #tpu.memory_space<vmem>>, %arg2: memref<4x36xf32, #tpu.memory_space<vmem>>, %arg3: memref<1x4x1xf32, #tpu.memory_space<vmem>>, %arg4: memref<1x4x1xf32, #tpu.memory_space<vmem>>, %arg5: memref<1x4x1xf32, #tpu.memory_space<vmem>>, %arg6: memref<1x4x1xf32, #tpu.memory_space<vmem>>, %arg7: memref<2x4x256xf32, #tpu.memory_space<vmem>>) attributes {dimension_semantics = [], scalar_prefetch = 0 : i64, scratch_operands = 0 : i64, tpu.core_type = #tpu.core_type<tc>} {
    %c0 = arith.constant 0 : index
    %c0_0 = arith.constant 0 : index
    %c0_1 = arith.constant 0 : index
    %0 = vector.load %arg0[%c0, %c0_0, %c0_1] : memref<2x4x256xf32, #tpu.memory_space<vmem>>, vector<2x4x256xf32>
    %1 = tpu.iota {dimensions = array<i32: 2>} : vector<1x1x256xi32>
    %c16_i32 = arith.constant 16 : i32
    %c0_i32 = arith.constant 0 : i32
    %2 = arith.cmpi eq, %c16_i32, %c0_i32 : i32
    %c1_i32 = arith.constant 1 : i32
    %3 = arith.select %2, %c1_i32, %c16_i32 : i32
    %4 = vector.broadcast %3 : i32 to vector<1x1x256xi32>
    %5 = arith.remsi %1, %4 : vector<1x1x256xi32>
    %c0_i32_2 = arith.constant 0 : i32
    %6 = vector.broadcast %c0_i32_2 : i32 to vector<1x1x256xi32>
    %7 = arith.cmpi ne, %5, %6 : vector<1x1x256xi32>
    %c0_i32_3 = arith.constant 0 : i32
    %8 = vector.broadcast %c0_i32_3 : i32 to vector<1x1x256xi32>
    %9 = arith.cmpi slt, %5, %8 : vector<1x1x256xi32>
    %c0_i32_4 = arith.constant 0 : i32
    %10 = arith.cmpi slt, %3, %c0_i32_4 : i32
    %11 = vector.broadcast %10 : i1 to vector<1x1x256xi1>
    %12 = vector.broadcast %11 : vector<1x1x256xi1> to vector<1x1x256xi1>
    %13 = arith.xori %9, %12 : vector<1x1x256xi1>
    %14 = arith.andi %13, %7 : vector<1x1x256xi1>
    %15 = vector.broadcast %3 : i32 to vector<1x1x256xi32>
    %16 = arith.addi %5, %15 : vector<1x1x256xi32>
    %17 = arith.select %14, %16, %5 : vector<1x1x256xi1>, vector<1x1x256xi32>
    %c-1_i32 = arith.constant -1 : i32
    %18 = vector.broadcast %c-1_i32 : i32 to vector<1x1x256xi32>
    %19 = arith.addi %17, %18 : vector<1x1x256xi32>
    %c0_i32_5 = arith.constant 0 : i32
    %20 = vector.broadcast %c0_i32_5 : i32 to vector<1x1x256xi32>
    %21 = arith.cmpi sge, %19, %20 : vector<1x1x256xi32>
    %c-1_i32_6 = arith.constant -1 : i32
    %22 = vector.broadcast %c-1_i32_6 : i32 to vector<1x1x256xi32>
    %23 = arith.addi %17, %22 : vector<1x1x256xi32>
    %c16_i32_7 = arith.constant 16 : i32
    %24 = vector.broadcast %c16_i32_7 : i32 to vector<1x1x256xi32>
    %25 = arith.cmpi slt, %23, %24 : vector<1x1x256xi32>
    %26 = arith.andi %21, %25 : vector<1x1x256xi1>
    %c0_i32_8 = arith.constant 0 : i32
    %27 = vector.broadcast %c0_i32_8 : i32 to vector<1x1x256xi32>
    %28 = arith.addi %17, %27 : vector<1x1x256xi32>
    %c0_i32_9 = arith.constant 0 : i32
    %29 = vector.broadcast %c0_i32_9 : i32 to vector<1x1x256xi32>
    %30 = arith.cmpi sge, %28, %29 : vector<1x1x256xi32>
    %c0_i32_10 = arith.constant 0 : i32
    %31 = vector.broadcast %c0_i32_10 : i32 to vector<1x1x256xi32>
    %32 = arith.addi %17, %31 : vector<1x1x256xi32>
    %c16_i32_11 = arith.constant 16 : i32
    %33 = vector.broadcast %c16_i32_11 : i32 to vector<1x1x256xi32>
    %34 = arith.cmpi slt, %32, %33 : vector<1x1x256xi32>
    %35 = arith.andi %30, %34 : vector<1x1x256xi1>
    %c1_i32_12 = arith.constant 1 : i32
    %36 = vector.broadcast %c1_i32_12 : i32 to vector<1x1x256xi32>
    %37 = arith.addi %17, %36 : vector<1x1x256xi32>
    %c0_i32_13 = arith.constant 0 : i32
    %38 = vector.broadcast %c0_i32_13 : i32 to vector<1x1x256xi32>
    %39 = arith.cmpi sge, %37, %38 : vector<1x1x256xi32>
    %c1_i32_14 = arith.constant 1 : i32
    %40 = vector.broadcast %c1_i32_14 : i32 to vector<1x1x256xi32>
    %41 = arith.addi %17, %40 : vector<1x1x256xi32>
    %c16_i32_15 = arith.constant 16 : i32
    %42 = vector.broadcast %c16_i32_15 : i32 to vector<1x1x256xi32>
    %43 = arith.cmpi slt, %41, %42 : vector<1x1x256xi32>
    %44 = arith.andi %39, %43 : vector<1x1x256xi1>
    %cst = arith.constant 0.000000e+00 : f32
    %45 = vector.broadcast %cst : f32 to vector<2x4x17xf32>
    %46 = vector.extract_strided_slice %0 {offsets = [0, 0, 0], sizes = [2, 4, 239], strides = [1, 1, 1]} : vector<2x4x256xf32> to vector<2x4x239xf32>
    %47 = tpu.concatenate %45, %46 in 2 : vector<2x4x17xf32>, vector<2x4x239xf32> -> vector<2x4x256xf32>
    %cst_16 = arith.constant 0.000000e+00 : f32
    %48 = vector.shape_cast %26 : vector<1x1x256xi1> to vector<1x1x256xi1>
    %49 = vector.broadcast %48 : vector<1x1x256xi1> to vector<2x4x256xi1>
    %50 = vector.broadcast %cst_16 : f32 to vector<2x4x256xf32>
    %51 = arith.select %49, %47, %50 : vector<2x4x256xi1>, vector<2x4x256xf32>
    %cst_17 = arith.constant 0.000000e+00 : f32
    %52 = vector.broadcast %cst_17 : f32 to vector<2x4x16xf32>
    %53 = vector.extract_strided_slice %0 {offsets = [0, 0, 0], sizes = [2, 4, 240], strides = [1, 1, 1]} : vector<2x4x256xf32> to vector<2x4x240xf32>
    %54 = tpu.concatenate %52, %53 in 2 : vector<2x4x16xf32>, vector<2x4x240xf32> -> vector<2x4x256xf32>
    %cst_18 = arith.constant 0.000000e+00 : f32
    %55 = vector.shape_cast %35 : vector<1x1x256xi1> to vector<1x1x256xi1>
    %56 = vector.broadcast %55 : vector<1x1x256xi1> to vector<2x4x256xi1>
    %57 = vector.broadcast %cst_18 : f32 to vector<2x4x256xf32>
    %58 = arith.select %56, %54, %57 : vector<2x4x256xi1>, vector<2x4x256xf32>
    %cst_19 = arith.constant 0.000000e+00 : f32
    %59 = vector.broadcast %cst_19 : f32 to vector<2x4x15xf32>
    %60 = vector.extract_strided_slice %0 {offsets = [0, 0, 0], sizes = [2, 4, 241], strides = [1, 1, 1]} : vector<2x4x256xf32> to vector<2x4x241xf32>
    %61 = tpu.concatenate %59, %60 in 2 : vector<2x4x15xf32>, vector<2x4x241xf32> -> vector<2x4x256xf32>
    %cst_20 = arith.constant 0.000000e+00 : f32
    %62 = vector.shape_cast %44 : vector<1x1x256xi1> to vector<1x1x256xi1>
    %63 = vector.broadcast %62 : vector<1x1x256xi1> to vector<2x4x256xi1>
    %64 = vector.broadcast %cst_20 : f32 to vector<2x4x256xf32>
    %65 = arith.select %63, %61, %64 : vector<2x4x256xi1>, vector<2x4x256xf32>
    %cst_21 = arith.constant 0.000000e+00 : f32
    %66 = vector.broadcast %cst_21 : f32 to vector<2x4x1xf32>
    %67 = vector.extract_strided_slice %0 {offsets = [0, 0, 0], sizes = [2, 4, 255], strides = [1, 1, 1]} : vector<2x4x256xf32> to vector<2x4x255xf32>
    %68 = tpu.concatenate %66, %67 in 2 : vector<2x4x1xf32>, vector<2x4x255xf32> -> vector<2x4x256xf32>
    %cst_22 = arith.constant 0.000000e+00 : f32
    %69 = vector.shape_cast %26 : vector<1x1x256xi1> to vector<1x1x256xi1>
    %70 = vector.broadcast %69 : vector<1x1x256xi1> to vector<2x4x256xi1>
    %71 = vector.broadcast %cst_22 : f32 to vector<2x4x256xf32>
    %72 = arith.select %70, %68, %71 : vector<2x4x256xi1>, vector<2x4x256xf32>
    %cst_23 = arith.constant 0.000000e+00 : f32
    %73 = vector.shape_cast %35 : vector<1x1x256xi1> to vector<1x1x256xi1>
    %74 = vector.broadcast %73 : vector<1x1x256xi1> to vector<2x4x256xi1>
    %75 = vector.broadcast %cst_23 : f32 to vector<2x4x256xf32>
    %76 = arith.select %74, %0, %75 : vector<2x4x256xi1>, vector<2x4x256xf32>
    %77 = vector.extract_strided_slice %0 {offsets = [0, 0, 1], sizes = [2, 4, 255], strides = [1, 1, 1]} : vector<2x4x256xf32> to vector<2x4x255xf32>
    %cst_24 = arith.constant 0.000000e+00 : f32
    %78 = vector.broadcast %cst_24 : f32 to vector<2x4x1xf32>
    %79 = tpu.concatenate %77, %78 in 2 : vector<2x4x255xf32>, vector<2x4x1xf32> -> vector<2x4x256xf32>
    %cst_25 = arith.constant 0.000000e+00 : f32
    %80 = vector.shape_cast %44 : vector<1x1x256xi1> to vector<1x1x256xi1>
    %81 = vector.broadcast %80 : vector<1x1x256xi1> to vector<2x4x256xi1>
    %82 = vector.broadcast %cst_25 : f32 to vector<2x4x256xf32>
    %83 = arith.select %81, %79, %82 : vector<2x4x256xi1>, vector<2x4x256xf32>
    %84 = vector.extract_strided_slice %0 {offsets = [0, 0, 15], sizes = [2, 4, 241], strides = [1, 1, 1]} : vector<2x4x256xf32> to vector<2x4x241xf32>
    %cst_26 = arith.constant 0.000000e+00 : f32
    %85 = vector.broadcast %cst_26 : f32 to vector<2x4x15xf32>
    %86 = tpu.concatenate %84, %85 in 2 : vector<2x4x241xf32>, vector<2x4x15xf32> -> vector<2x4x256xf32>
    %cst_27 = arith.constant 0.000000e+00 : f32
    %87 = vector.shape_cast %26 : vector<1x1x256xi1> to vector<1x1x256xi1>
    %88 = vector.broadcast %87 : vector<1x1x256xi1> to vector<2x4x256xi1>
    %89 = vector.broadcast %cst_27 : f32 to vector<2x4x256xf32>
    %90 = arith.select %88, %86, %89 : vector<2x4x256xi1>, vector<2x4x256xf32>
    %91 = vector.extract_strided_slice %0 {offsets = [0, 0, 16], sizes = [2, 4, 240], strides = [1, 1, 1]} : vector<2x4x256xf32> to vector<2x4x240xf32>
    %cst_28 = arith.constant 0.000000e+00 : f32
    %92 = vector.broadcast %cst_28 : f32 to vector<2x4x16xf32>
    %93 = tpu.concatenate %91, %92 in 2 : vector<2x4x240xf32>, vector<2x4x16xf32> -> vector<2x4x256xf32>
    %cst_29 = arith.constant 0.000000e+00 : f32
    %94 = vector.shape_cast %35 : vector<1x1x256xi1> to vector<1x1x256xi1>
    %95 = vector.broadcast %94 : vector<1x1x256xi1> to vector<2x4x256xi1>
    %96 = vector.broadcast %cst_29 : f32 to vector<2x4x256xf32>
    %97 = arith.select %95, %93, %96 : vector<2x4x256xi1>, vector<2x4x256xf32>
    %98 = vector.extract_strided_slice %0 {offsets = [0, 0, 17], sizes = [2, 4, 239], strides = [1, 1, 1]} : vector<2x4x256xf32> to vector<2x4x239xf32>
    %cst_30 = arith.constant 0.000000e+00 : f32
    %99 = vector.broadcast %cst_30 : f32 to vector<2x4x17xf32>
    %100 = tpu.concatenate %98, %99 in 2 : vector<2x4x239xf32>, vector<2x4x17xf32> -> vector<2x4x256xf32>
    %cst_31 = arith.constant 0.000000e+00 : f32
    %101 = vector.shape_cast %44 : vector<1x1x256xi1> to vector<1x1x256xi1>
    %102 = vector.broadcast %101 : vector<1x1x256xi1> to vector<2x4x256xi1>
    %103 = vector.broadcast %cst_31 : f32 to vector<2x4x256xf32>
    %104 = arith.select %102, %100, %103 : vector<2x4x256xi1>, vector<2x4x256xf32>
    %105 = tpu.concatenate %51, %58, %65, %72, %76, %83, %90, %97, %104 in 1 : vector<2x4x256xf32>, vector<2x4x256xf32>, vector<2x4x256xf32>, vector<2x4x256xf32>, vector<2x4x256xf32>, vector<2x4x256xf32>, vector<2x4x256xf32>, vector<2x4x256xf32>, vector<2x4x256xf32> -> vector<2x36x256xf32>
    %c0_32 = arith.constant 0 : index
    %c0_33 = arith.constant 0 : index
    %106 = vector.load %arg1[%c0_32, %c0_33] : memref<4x36xf32, #tpu.memory_space<vmem>>, vector<4x36xf32>
    %107 = vector.extract_strided_slice %105 {offsets = [0, 0, 0], sizes = [1, 36, 256], strides = [1, 1, 1]} : vector<2x36x256xf32> to vector<1x36x256xf32>
    %108 = vector.shape_cast %107 : vector<1x36x256xf32> to vector<36x256xf32>
    %cst_34 = arith.constant dense<0.000000e+00> : vector<4x256xf32>
    %109 = tpu.matmul %106, %108, %cst_34 {dimension_numbers = #tpu.dot_dimension_numbers<[1], [0], [0], [1], [0, 0, 1, 1], [], []>} : vector<4x36xf32>, vector<36x256xf32>, vector<4x256xf32> -> vector<4x256xf32>
    %110 = vector.extract_strided_slice %105 {offsets = [1, 0, 0], sizes = [1, 36, 256], strides = [1, 1, 1]} : vector<2x36x256xf32> to vector<1x36x256xf32>
    %111 = vector.shape_cast %110 : vector<1x36x256xf32> to vector<36x256xf32>
    %cst_35 = arith.constant dense<0.000000e+00> : vector<4x256xf32>
    %112 = tpu.matmul %106, %111, %cst_35 {dimension_numbers = #tpu.dot_dimension_numbers<[1], [0], [0], [1], [0, 0, 1, 1], [], []>} : vector<4x36xf32>, vector<36x256xf32>, vector<4x256xf32> -> vector<4x256xf32>
    %113 = vector.shape_cast %109 : vector<4x256xf32> to vector<1x4x256xf32>
    %114 = vector.shape_cast %112 : vector<4x256xf32> to vector<1x4x256xf32>
    %115 = tpu.concatenate %113, %114 in 0 : vector<1x4x256xf32>, vector<1x4x256xf32> -> vector<2x4x256xf32>
    %cst_36 = arith.constant dense<0.000000e+00> : vector<4xf32>
    %116 = vector.multi_reduction <add>, %115, %cst_36 [0, 2] : vector<2x4x256xf32> to vector<4xf32>
    %117 = vector.shape_cast %116 : vector<4xf32> to vector<1x4x1xf32>
    %cst_37 = arith.constant 5.120000e+02 : f32
    %118 = vector.broadcast %cst_37 : f32 to vector<1x4x1xf32>
    %119 = arith.divf %117, %118 : vector<1x4x1xf32>
    %120 = vector.broadcast %119 : vector<1x4x1xf32> to vector<2x4x256xf32>
    %121 = arith.subf %115, %120 : vector<2x4x256xf32>
    %122 = arith.mulf %121, %121 : vector<2x4x256xf32>
    %cst_38 = arith.constant dense<0.000000e+00> : vector<4xf32>
    %123 = vector.multi_reduction <add>, %122, %cst_38 [0, 2] : vector<2x4x256xf32> to vector<4xf32>
    %124 = vector.shape_cast %123 : vector<4xf32> to vector<1x4x1xf32>
    %cst_39 = arith.constant 5.120000e+02 : f32
    %125 = vector.broadcast %cst_39 : f32 to vector<1x4x1xf32>
    %126 = arith.divf %124, %125 : vector<1x4x1xf32>
    %127 = vector.broadcast %119 : vector<1x4x1xf32> to vector<2x4x256xf32>
    %128 = arith.subf %115, %127 : vector<2x4x256xf32>
    %cst_40 = arith.constant 9.99999974E-6 : f32
    %129 = vector.broadcast %cst_40 : f32 to vector<1x4x1xf32>
    %130 = arith.addf %126, %129 : vector<1x4x1xf32>
    %131 = math.rsqrt %130 : vector<1x4x1xf32>
    %132 = vector.broadcast %131 : vector<1x4x1xf32> to vector<2x4x256xf32>
    %133 = arith.mulf %128, %132 : vector<2x4x256xf32>
    %c0_41 = arith.constant 0 : index
    %c0_42 = arith.constant 0 : index
    %c0_43 = arith.constant 0 : index
    %134 = vector.load %arg3[%c0_41, %c0_42, %c0_43] : memref<1x4x1xf32, #tpu.memory_space<vmem>>, vector<1x4x1xf32>
    %135 = vector.broadcast %134 : vector<1x4x1xf32> to vector<2x4x256xf32>
    %136 = arith.mulf %133, %135 : vector<2x4x256xf32>
    %c0_44 = arith.constant 0 : index
    %c0_45 = arith.constant 0 : index
    %c0_46 = arith.constant 0 : index
    %137 = vector.load %arg4[%c0_44, %c0_45, %c0_46] : memref<1x4x1xf32, #tpu.memory_space<vmem>>, vector<1x4x1xf32>
    %138 = vector.broadcast %137 : vector<1x4x1xf32> to vector<2x4x256xf32>
    %139 = arith.addf %136, %138 : vector<2x4x256xf32>
    %cst_47 = arith.constant 0.000000e+00 : f32
    %140 = vector.broadcast %cst_47 : f32 to vector<2x4x256xf32>
    %141 = arith.maximumf %139, %140 : vector<2x4x256xf32>
    %142 = tpu.iota {dimensions = array<i32: 2>} : vector<1x1x256xi32>
    %c16_i32_48 = arith.constant 16 : i32
    %c0_i32_49 = arith.constant 0 : i32
    %143 = arith.cmpi eq, %c16_i32_48, %c0_i32_49 : i32
    %c1_i32_50 = arith.constant 1 : i32
    %144 = arith.select %143, %c1_i32_50, %c16_i32_48 : i32
    %145 = vector.broadcast %144 : i32 to vector<1x1x256xi32>
    %146 = arith.remsi %142, %145 : vector<1x1x256xi32>
    %c0_i32_51 = arith.constant 0 : i32
    %147 = vector.broadcast %c0_i32_51 : i32 to vector<1x1x256xi32>
    %148 = arith.cmpi ne, %146, %147 : vector<1x1x256xi32>
    %c0_i32_52 = arith.constant 0 : i32
    %149 = vector.broadcast %c0_i32_52 : i32 to vector<1x1x256xi32>
    %150 = arith.cmpi slt, %146, %149 : vector<1x1x256xi32>
    %c0_i32_53 = arith.constant 0 : i32
    %151 = arith.cmpi slt, %144, %c0_i32_53 : i32
    %152 = vector.broadcast %151 : i1 to vector<1x1x256xi1>
    %153 = vector.broadcast %152 : vector<1x1x256xi1> to vector<1x1x256xi1>
    %154 = arith.xori %150, %153 : vector<1x1x256xi1>
    %155 = arith.andi %154, %148 : vector<1x1x256xi1>
    %156 = vector.broadcast %144 : i32 to vector<1x1x256xi32>
    %157 = arith.addi %146, %156 : vector<1x1x256xi32>
    %158 = arith.select %155, %157, %146 : vector<1x1x256xi1>, vector<1x1x256xi32>
    %c-1_i32_54 = arith.constant -1 : i32
    %159 = vector.broadcast %c-1_i32_54 : i32 to vector<1x1x256xi32>
    %160 = arith.addi %158, %159 : vector<1x1x256xi32>
    %c0_i32_55 = arith.constant 0 : i32
    %161 = vector.broadcast %c0_i32_55 : i32 to vector<1x1x256xi32>
    %162 = arith.cmpi sge, %160, %161 : vector<1x1x256xi32>
    %c-1_i32_56 = arith.constant -1 : i32
    %163 = vector.broadcast %c-1_i32_56 : i32 to vector<1x1x256xi32>
    %164 = arith.addi %158, %163 : vector<1x1x256xi32>
    %c16_i32_57 = arith.constant 16 : i32
    %165 = vector.broadcast %c16_i32_57 : i32 to vector<1x1x256xi32>
    %166 = arith.cmpi slt, %164, %165 : vector<1x1x256xi32>
    %167 = arith.andi %162, %166 : vector<1x1x256xi1>
    %c0_i32_58 = arith.constant 0 : i32
    %168 = vector.broadcast %c0_i32_58 : i32 to vector<1x1x256xi32>
    %169 = arith.addi %158, %168 : vector<1x1x256xi32>
    %c0_i32_59 = arith.constant 0 : i32
    %170 = vector.broadcast %c0_i32_59 : i32 to vector<1x1x256xi32>
    %171 = arith.cmpi sge, %169, %170 : vector<1x1x256xi32>
    %c0_i32_60 = arith.constant 0 : i32
    %172 = vector.broadcast %c0_i32_60 : i32 to vector<1x1x256xi32>
    %173 = arith.addi %158, %172 : vector<1x1x256xi32>
    %c16_i32_61 = arith.constant 16 : i32
    %174 = vector.broadcast %c16_i32_61 : i32 to vector<1x1x256xi32>
    %175 = arith.cmpi slt, %173, %174 : vector<1x1x256xi32>
    %176 = arith.andi %171, %175 : vector<1x1x256xi1>
    %c1_i32_62 = arith.constant 1 : i32
    %177 = vector.broadcast %c1_i32_62 : i32 to vector<1x1x256xi32>
    %178 = arith.addi %158, %177 : vector<1x1x256xi32>
    %c0_i32_63 = arith.constant 0 : i32
    %179 = vector.broadcast %c0_i32_63 : i32 to vector<1x1x256xi32>
    %180 = arith.cmpi sge, %178, %179 : vector<1x1x256xi32>
    %c1_i32_64 = arith.constant 1 : i32
    %181 = vector.broadcast %c1_i32_64 : i32 to vector<1x1x256xi32>
    %182 = arith.addi %158, %181 : vector<1x1x256xi32>
    %c16_i32_65 = arith.constant 16 : i32
    %183 = vector.broadcast %c16_i32_65 : i32 to vector<1x1x256xi32>
    %184 = arith.cmpi slt, %182, %183 : vector<1x1x256xi32>
    %185 = arith.andi %180, %184 : vector<1x1x256xi1>
    %cst_66 = arith.constant 0.000000e+00 : f32
    %186 = vector.broadcast %cst_66 : f32 to vector<2x4x17xf32>
    %187 = vector.extract_strided_slice %141 {offsets = [0, 0, 0], sizes = [2, 4, 239], strides = [1, 1, 1]} : vector<2x4x256xf32> to vector<2x4x239xf32>
    %188 = tpu.concatenate %186, %187 in 2 : vector<2x4x17xf32>, vector<2x4x239xf32> -> vector<2x4x256xf32>
    %cst_67 = arith.constant 0.000000e+00 : f32
    %189 = vector.shape_cast %167 : vector<1x1x256xi1> to vector<1x1x256xi1>
    %190 = vector.broadcast %189 : vector<1x1x256xi1> to vector<2x4x256xi1>
    %191 = vector.broadcast %cst_67 : f32 to vector<2x4x256xf32>
    %192 = arith.select %190, %188, %191 : vector<2x4x256xi1>, vector<2x4x256xf32>
    %cst_68 = arith.constant 0.000000e+00 : f32
    %193 = vector.broadcast %cst_68 : f32 to vector<2x4x16xf32>
    %194 = vector.extract_strided_slice %141 {offsets = [0, 0, 0], sizes = [2, 4, 240], strides = [1, 1, 1]} : vector<2x4x256xf32> to vector<2x4x240xf32>
    %195 = tpu.concatenate %193, %194 in 2 : vector<2x4x16xf32>, vector<2x4x240xf32> -> vector<2x4x256xf32>
    %cst_69 = arith.constant 0.000000e+00 : f32
    %196 = vector.shape_cast %176 : vector<1x1x256xi1> to vector<1x1x256xi1>
    %197 = vector.broadcast %196 : vector<1x1x256xi1> to vector<2x4x256xi1>
    %198 = vector.broadcast %cst_69 : f32 to vector<2x4x256xf32>
    %199 = arith.select %197, %195, %198 : vector<2x4x256xi1>, vector<2x4x256xf32>
    %cst_70 = arith.constant 0.000000e+00 : f32
    %200 = vector.broadcast %cst_70 : f32 to vector<2x4x15xf32>
    %201 = vector.extract_strided_slice %141 {offsets = [0, 0, 0], sizes = [2, 4, 241], strides = [1, 1, 1]} : vector<2x4x256xf32> to vector<2x4x241xf32>
    %202 = tpu.concatenate %200, %201 in 2 : vector<2x4x15xf32>, vector<2x4x241xf32> -> vector<2x4x256xf32>
    %cst_71 = arith.constant 0.000000e+00 : f32
    %203 = vector.shape_cast %185 : vector<1x1x256xi1> to vector<1x1x256xi1>
    %204 = vector.broadcast %203 : vector<1x1x256xi1> to vector<2x4x256xi1>
    %205 = vector.broadcast %cst_71 : f32 to vector<2x4x256xf32>
    %206 = arith.select %204, %202, %205 : vector<2x4x256xi1>, vector<2x4x256xf32>
    %cst_72 = arith.constant 0.000000e+00 : f32
    %207 = vector.broadcast %cst_72 : f32 to vector<2x4x1xf32>
    %208 = vector.extract_strided_slice %141 {offsets = [0, 0, 0], sizes = [2, 4, 255], strides = [1, 1, 1]} : vector<2x4x256xf32> to vector<2x4x255xf32>
    %209 = tpu.concatenate %207, %208 in 2 : vector<2x4x1xf32>, vector<2x4x255xf32> -> vector<2x4x256xf32>
    %cst_73 = arith.constant 0.000000e+00 : f32
    %210 = vector.shape_cast %167 : vector<1x1x256xi1> to vector<1x1x256xi1>
    %211 = vector.broadcast %210 : vector<1x1x256xi1> to vector<2x4x256xi1>
    %212 = vector.broadcast %cst_73 : f32 to vector<2x4x256xf32>
    %213 = arith.select %211, %209, %212 : vector<2x4x256xi1>, vector<2x4x256xf32>
    %cst_74 = arith.constant 0.000000e+00 : f32
    %214 = vector.shape_cast %176 : vector<1x1x256xi1> to vector<1x1x256xi1>
    %215 = vector.broadcast %214 : vector<1x1x256xi1> to vector<2x4x256xi1>
    %216 = vector.broadcast %cst_74 : f32 to vector<2x4x256xf32>
    %217 = arith.select %215, %141, %216 : vector<2x4x256xi1>, vector<2x4x256xf32>
    %218 = vector.extract_strided_slice %141 {offsets = [0, 0, 1], sizes = [2, 4, 255], strides = [1, 1, 1]} : vector<2x4x256xf32> to vector<2x4x255xf32>
    %cst_75 = arith.constant 0.000000e+00 : f32
    %219 = vector.broadcast %cst_75 : f32 to vector<2x4x1xf32>
    %220 = tpu.concatenate %218, %219 in 2 : vector<2x4x255xf32>, vector<2x4x1xf32> -> vector<2x4x256xf32>
    %cst_76 = arith.constant 0.000000e+00 : f32
    %221 = vector.shape_cast %185 : vector<1x1x256xi1> to vector<1x1x256xi1>
    %222 = vector.broadcast %221 : vector<1x1x256xi1> to vector<2x4x256xi1>
    %223 = vector.broadcast %cst_76 : f32 to vector<2x4x256xf32>
    %224 = arith.select %222, %220, %223 : vector<2x4x256xi1>, vector<2x4x256xf32>
    %225 = vector.extract_strided_slice %141 {offsets = [0, 0, 15], sizes = [2, 4, 241], strides = [1, 1, 1]} : vector<2x4x256xf32> to vector<2x4x241xf32>
    %cst_77 = arith.constant 0.000000e+00 : f32
    %226 = vector.broadcast %cst_77 : f32 to vector<2x4x15xf32>
    %227 = tpu.concatenate %225, %226 in 2 : vector<2x4x241xf32>, vector<2x4x15xf32> -> vector<2x4x256xf32>
    %cst_78 = arith.constant 0.000000e+00 : f32
    %228 = vector.shape_cast %167 : vector<1x1x256xi1> to vector<1x1x256xi1>
    %229 = vector.broadcast %228 : vector<1x1x256xi1> to vector<2x4x256xi1>
    %230 = vector.broadcast %cst_78 : f32 to vector<2x4x256xf32>
    %231 = arith.select %229, %227, %230 : vector<2x4x256xi1>, vector<2x4x256xf32>
    %232 = vector.extract_strided_slice %141 {offsets = [0, 0, 16], sizes = [2, 4, 240], strides = [1, 1, 1]} : vector<2x4x256xf32> to vector<2x4x240xf32>
    %cst_79 = arith.constant 0.000000e+00 : f32
    %233 = vector.broadcast %cst_79 : f32 to vector<2x4x16xf32>
    %234 = tpu.concatenate %232, %233 in 2 : vector<2x4x240xf32>, vector<2x4x16xf32> -> vector<2x4x256xf32>
    %cst_80 = arith.constant 0.000000e+00 : f32
    %235 = vector.shape_cast %176 : vector<1x1x256xi1> to vector<1x1x256xi1>
    %236 = vector.broadcast %235 : vector<1x1x256xi1> to vector<2x4x256xi1>
    %237 = vector.broadcast %cst_80 : f32 to vector<2x4x256xf32>
    %238 = arith.select %236, %234, %237 : vector<2x4x256xi1>, vector<2x4x256xf32>
    %239 = vector.extract_strided_slice %141 {offsets = [0, 0, 17], sizes = [2, 4, 239], strides = [1, 1, 1]} : vector<2x4x256xf32> to vector<2x4x239xf32>
    %cst_81 = arith.constant 0.000000e+00 : f32
    %240 = vector.broadcast %cst_81 : f32 to vector<2x4x17xf32>
    %241 = tpu.concatenate %239, %240 in 2 : vector<2x4x239xf32>, vector<2x4x17xf32> -> vector<2x4x256xf32>
    %cst_82 = arith.constant 0.000000e+00 : f32
    %242 = vector.shape_cast %185 : vector<1x1x256xi1> to vector<1x1x256xi1>
    %243 = vector.broadcast %242 : vector<1x1x256xi1> to vector<2x4x256xi1>
    %244 = vector.broadcast %cst_82 : f32 to vector<2x4x256xf32>
    %245 = arith.select %243, %241, %244 : vector<2x4x256xi1>, vector<2x4x256xf32>
    %246 = tpu.concatenate %192, %199, %206, %213, %217, %224, %231, %238, %245 in 1 : vector<2x4x256xf32>, vector<2x4x256xf32>, vector<2x4x256xf32>, vector<2x4x256xf32>, vector<2x4x256xf32>, vector<2x4x256xf32>, vector<2x4x256xf32>, vector<2x4x256xf32>, vector<2x4x256xf32> -> vector<2x36x256xf32>
    %c0_83 = arith.constant 0 : index
    %c0_84 = arith.constant 0 : index
    %247 = vector.load %arg2[%c0_83, %c0_84] : memref<4x36xf32, #tpu.memory_space<vmem>>, vector<4x36xf32>
    %248 = vector.extract_strided_slice %246 {offsets = [0, 0, 0], sizes = [1, 36, 256], strides = [1, 1, 1]} : vector<2x36x256xf32> to vector<1x36x256xf32>
    %249 = vector.shape_cast %248 : vector<1x36x256xf32> to vector<36x256xf32>
    %cst_85 = arith.constant dense<0.000000e+00> : vector<4x256xf32>
    %250 = tpu.matmul %247, %249, %cst_85 {dimension_numbers = #tpu.dot_dimension_numbers<[1], [0], [0], [1], [0, 0, 1, 1], [], []>} : vector<4x36xf32>, vector<36x256xf32>, vector<4x256xf32> -> vector<4x256xf32>
    %251 = vector.extract_strided_slice %246 {offsets = [1, 0, 0], sizes = [1, 36, 256], strides = [1, 1, 1]} : vector<2x36x256xf32> to vector<1x36x256xf32>
    %252 = vector.shape_cast %251 : vector<1x36x256xf32> to vector<36x256xf32>
    %cst_86 = arith.constant dense<0.000000e+00> : vector<4x256xf32>
    %253 = tpu.matmul %247, %252, %cst_86 {dimension_numbers = #tpu.dot_dimension_numbers<[1], [0], [0], [1], [0, 0, 1, 1], [], []>} : vector<4x36xf32>, vector<36x256xf32>, vector<4x256xf32> -> vector<4x256xf32>
    %254 = vector.shape_cast %250 : vector<4x256xf32> to vector<1x4x256xf32>
    %255 = vector.shape_cast %253 : vector<4x256xf32> to vector<1x4x256xf32>
    %256 = tpu.concatenate %254, %255 in 0 : vector<1x4x256xf32>, vector<1x4x256xf32> -> vector<2x4x256xf32>
    %cst_87 = arith.constant dense<0.000000e+00> : vector<4xf32>
    %257 = vector.multi_reduction <add>, %256, %cst_87 [0, 2] : vector<2x4x256xf32> to vector<4xf32>
    %258 = vector.shape_cast %257 : vector<4xf32> to vector<1x4x1xf32>
    %cst_88 = arith.constant 5.120000e+02 : f32
    %259 = vector.broadcast %cst_88 : f32 to vector<1x4x1xf32>
    %260 = arith.divf %258, %259 : vector<1x4x1xf32>
    %261 = vector.broadcast %260 : vector<1x4x1xf32> to vector<2x4x256xf32>
    %262 = arith.subf %256, %261 : vector<2x4x256xf32>
    %263 = arith.mulf %262, %262 : vector<2x4x256xf32>
    %cst_89 = arith.constant dense<0.000000e+00> : vector<4xf32>
    %264 = vector.multi_reduction <add>, %263, %cst_89 [0, 2] : vector<2x4x256xf32> to vector<4xf32>
    %265 = vector.shape_cast %264 : vector<4xf32> to vector<1x4x1xf32>
    %cst_90 = arith.constant 5.120000e+02 : f32
    %266 = vector.broadcast %cst_90 : f32 to vector<1x4x1xf32>
    %267 = arith.divf %265, %266 : vector<1x4x1xf32>
    %268 = vector.broadcast %260 : vector<1x4x1xf32> to vector<2x4x256xf32>
    %269 = arith.subf %256, %268 : vector<2x4x256xf32>
    %cst_91 = arith.constant 9.99999974E-6 : f32
    %270 = vector.broadcast %cst_91 : f32 to vector<1x4x1xf32>
    %271 = arith.addf %267, %270 : vector<1x4x1xf32>
    %272 = math.rsqrt %271 : vector<1x4x1xf32>
    %273 = vector.broadcast %272 : vector<1x4x1xf32> to vector<2x4x256xf32>
    %274 = arith.mulf %269, %273 : vector<2x4x256xf32>
    %c0_92 = arith.constant 0 : index
    %c0_93 = arith.constant 0 : index
    %c0_94 = arith.constant 0 : index
    %275 = vector.load %arg5[%c0_92, %c0_93, %c0_94] : memref<1x4x1xf32, #tpu.memory_space<vmem>>, vector<1x4x1xf32>
    %276 = vector.broadcast %275 : vector<1x4x1xf32> to vector<2x4x256xf32>
    %277 = arith.mulf %274, %276 : vector<2x4x256xf32>
    %c0_95 = arith.constant 0 : index
    %c0_96 = arith.constant 0 : index
    %c0_97 = arith.constant 0 : index
    %278 = vector.load %arg6[%c0_95, %c0_96, %c0_97] : memref<1x4x1xf32, #tpu.memory_space<vmem>>, vector<1x4x1xf32>
    %279 = vector.broadcast %278 : vector<1x4x1xf32> to vector<2x4x256xf32>
    %280 = arith.addf %277, %279 : vector<2x4x256xf32>
    %281 = arith.addf %280, %0 : vector<2x4x256xf32>
    %cst_98 = arith.constant 0.000000e+00 : f32
    %282 = vector.broadcast %cst_98 : f32 to vector<2x4x256xf32>
    %283 = arith.maximumf %281, %282 : vector<2x4x256xf32>
    %c0_99 = arith.constant 0 : index
    %c0_100 = arith.constant 0 : index
    %c0_101 = arith.constant 0 : index
    %284 = vector.load %arg7[%c0_99, %c0_100, %c0_101] : memref<2x4x256xf32, #tpu.memory_space<vmem>>, vector<2x4x256xf32>
    tpu.vector_store %arg7[%c0_99, %c0_100, %c0_101], %283 {strides = array<i32>} : memref<2x4x256xf32, #tpu.memory_space<vmem>>, vector<2x4x256xf32>,
    return
  }
}

</mosaic_0001>

<llo_original>
// kernel: basic_block_forward.1
$region0: #{basic_block_forward.1}
  #allocation0 [shape = 'u32[]', space=smem, size = 0x4, offset = 0x4, fixed_abs, tag = 'smem constant byte address 0x4 - core index']
  #allocation1 [shape = 'u32[144,128]{1,0:T(1,128)}', space=vmem, size = 0x12000, scoped, tag = 'internal scratch']
  %s0 = inlined_call_operand.vmem [shape: f32[2,4,256], index: 0, kind: input, shape index: {}]
  %s1 = inlined_call_operand.vmem [shape: f32[4,36], index: 1, kind: input, shape index: {}]
  %s2 = inlined_call_operand.vmem [shape: f32[4,36], index: 2, kind: input, shape index: {}]
  %s3 = inlined_call_operand.vmem [shape: f32[1,4,1], index: 3, kind: input, shape index: {}]
  %s4 = inlined_call_operand.vmem [shape: f32[1,4,1], index: 4, kind: input, shape index: {}]
  %s5 = inlined_call_operand.vmem [shape: f32[1,4,1], index: 5, kind: input, shape index: {}]
  %s6 = inlined_call_operand.vmem [shape: f32[1,4,1], index: 6, kind: input, shape index: {}]
  %s7 = inlined_call_operand.vmem [shape: f32[2,4,256], index: 7, kind: output, shape index: {}]
  %s8 = sld [smem:[#allocation0]]
  $region38: #{basic_block_forward.1} parent=0
    _
  %s10 = ssub.s32 1, %s8
  %s11 = scalar_select 0, %s10, %s8
  // Predicated region
  $region2: #{basic_block_forward.1} parent=0 // pred_check
    _
  $region3: #{basic_block_forward.1} parent=0 // pred_check_branch
    %13 = sbr.rel (0) target = $region5
  $region4: #{basic_block_forward.1} parent=0 // pred_region
    _
  $region5: #{basic_block_forward.1} parent=0 // pred_fallthru
    _
  // Predicated region
  $region6: #{basic_block_forward.1} parent=0 // pred_check
    _
  $region7: #{basic_block_forward.1} parent=0 // pred_check_branch
    %15 = sbr.rel (0) target = $region9
  $region8: #{basic_block_forward.1} parent=0 // pred_region
    _
  $region9: #{basic_block_forward.1} parent=0 // pred_fallthru
    _
  // Predicated region
  $region10: #{basic_block_forward.1} parent=0 // pred_check
    _
  $region11: #{basic_block_forward.1} parent=0 // pred_check_branch
    %17 = sbr.rel (0) target = $region13
  $region12: #{basic_block_forward.1} parent=0 // pred_region
    _
  $region13: #{basic_block_forward.1} parent=0 // pred_fallthru
    _
  // Predicated region
  $region14: #{basic_block_forward.1} parent=0 // pred_check
    _
  $region15: #{basic_block_forward.1} parent=0 // pred_check_branch
    %19 = sbr.rel (0) target = $region17
  $region16: #{basic_block_forward.1} parent=0 // pred_region
    _
  $region17: #{basic_block_forward.1} parent=0 // pred_fallthru
    _
  // Predicated region
  $region18: #{basic_block_forward.1} parent=0 // pred_check
    _
  $region19: #{basic_block_forward.1} parent=0 // pred_check_branch
    %21 = sbr.rel (0) target = $region21
  $region20: #{basic_block_forward.1} parent=0 // pred_region
    _
  $region21: #{basic_block_forward.1} parent=0 // pred_fallthru
    _
  // Predicated region
  $region22: #{basic_block_forward.1} parent=0 // pred_check
    _
  $region23: #{basic_block_forward.1} parent=0 // pred_check_branch
    %23 = sbr.rel (0) target = $region25
  $region24: #{basic_block_forward.1} parent=0 // pred_region
    _
  $region25: #{basic_block_forward.1} parent=0 // pred_fallthru
    _
  // Predicated region
  $region26: #{basic_block_forward.1} parent=0 // pred_check
    _
  $region27: #{basic_block_forward.1} parent=0 // pred_check_branch
    %25 = sbr.rel (0) target = $region29
  $region28: #{basic_block_forward.1} parent=0 // pred_region
    _
  $region29: #{basic_block_forward.1} parent=0 // pred_fallthru
    _
  %v26 = vld [vmem:[%s0] sm:$0xff]
  %v27 = vld [vmem:[%s0 + $0x8] sm:$0xff]
  %v28 = vlaneseq
  %v29 = vand.u32 %v28, 127
  %v30 = vadd.s32 %v29, 128
  %vm31 = vcmp.lt.s32.totalorder %v29, 0
  %v32 = vsub.s32 0, %v29
  %v33 = vsel %vm31, %v32, %v29
  %v34 = vshrl.u32 %v33, 4
  %v35 = vand.u32 %v33, 15
  %v36 = vsub.s32 0, %v35
  %v37 = vsel %vm31, %v36, %v35
  %vm38 = vcmp.lt.s32.totalorder %v30, 0
  %v39 = vsub.s32 0, %v30
  %v40 = vsel %vm38, %v39, %v30
  %v41 = vshrl.u32 %v40, 4
  %v42 = vand.u32 %v40, 15
  %v43 = vsub.s32 0, %v42
  %v44 = vsel %vm38, %v43, %v42
  %vm45 = vcmp.ne.s32.totalorder %v37, 0
  %vm46 = vcmp.ne.s32.totalorder %v44, 0
  %vm47 = vcmp.lt.s32.totalorder %v37, 0
  %vm48 = vcmp.lt.s32.totalorder %v44, 0
  %vm49 = vmand %vm47, %vm45
  %vm50 = vmand %vm48, %vm46
  %v51 = vadd.s32 %v37, 16
  %v52 = vadd.s32 %v44, 16
  %v53 = vsel %vm49, %v51, %v37
  %v54 = vsel %vm50, %v52, %v44
  %v55 = vadd.s32 %v53, 4294967295
  %v56 = vadd.s32 %v54, 4294967295
  %vm57 = vcmp.ge.s32.totalorder %v55, 0
  %vm58 = vcmp.ge.s32.totalorder %v56, 0
  %vm59 = vcmp.lt.s32.totalorder %v55, 16
  %vm60 = vcmp.lt.s32.totalorder %v56, 16
  %vm61 = vmand %vm57, %vm59
  %vm62 = vmand %vm58, %vm60
  %vm63 = vcmp.ge.s32.totalorder %v53, 0
  %vm64 = vcmp.ge.s32.totalorder %v54, 0
  %vm65 = vcmp.lt.s32.totalorder %v53, 16
  %vm66 = vcmp.lt.s32.totalorder %v54, 16
  %vm67 = vmand %vm63, %vm65
  %vm68 = vmand %vm64, %vm66
  %v69 = vadd.s32 %v53, 1
  %v70 = vadd.s32 %v54, 1
  %vm71 = vcmp.ge.s32.totalorder %v69, 0
  %vm72 = vcmp.ge.s32.totalorder %v70, 0
  %vm73 = vcmp.lt.s32.totalorder %v69, 16
  %vm74 = vcmp.lt.s32.totalorder %v70, 16
  %vm75 = vmand %vm71, %vm73
  %vm76 = vmand %vm72, %vm74
  %v79 = vcombine.high %v26, %v26
  %v80 = vcombine.high %v27, %v27
  %81 = vrot.lane.b32.xlu0 %v26, 17
  %v82 = vpop.permute.xlu0 %81
  %83 = vrot.lane.b32.xlu0 %v79, 17
  %v84 = vpop.permute.xlu0 %83
  %85 = vrot.lane.b32.xlu0 %v27, 17
  %v86 = vpop.permute.xlu0 %85
  %87 = vrot.lane.b32.xlu0 %v80, 17
  %v88 = vpop.permute.xlu0 %87
  %vm89 = vcmask 138240
  %v90 = vsel %vm89, %v82, %v84
  %v91 = vsel %vm89, %v86, %v88
  %v96 = vsel %vm89, 0.0, %v82
  %v97 = vsel %vm89, 0.0, %v86
  %v98 = vsel %vm61, 1, 0
  %v99 = vsel %vm62, 1, 0
  %vm100 = vcmp.eq.s32.totalorder %v98, 1
  %vm101 = vcmp.eq.s32.totalorder %v99, 1
  %v102 = vsel %vm100, %v96, 0.0
  %v103 = vsel %vm101, %v90, 0.0
  %v104 = vsel %vm100, %v97, 0.0
  %v105 = vsel %vm101, %v91, 0.0
  %106 = vrot.lane.b32.xlu0 %v26, 16
  %v107 = vpop.permute.xlu0 %106
  %108 = vrot.lane.b32.xlu0 %v79, 16
  %v109 = vpop.permute.xlu0 %108
  %110 = vrot.lane.b32.xlu0 %v27, 16
  %v111 = vpop.permute.xlu0 %110
  %112 = vrot.lane.b32.xlu0 %v80, 16
  %v113 = vpop.permute.xlu0 %112
  %vm114 = vcmask 130048
  %v115 = vsel %vm114, %v107, %v109
  %v116 = vsel %vm114, %v111, %v113
  %v121 = vsel %vm114, 0.0, %v107
  %v122 = vsel %vm114, 0.0, %v111
  %v123 = vsel %vm67, 1, 0
  %v124 = vsel %vm68, 1, 0
  %vm125 = vcmp.eq.s32.totalorder %v123, 1
  %vm126 = vcmp.eq.s32.totalorder %v124, 1
  %v127 = vsel %vm125, %v121, 0.0
  %v128 = vsel %vm126, %v115, 0.0
  %v129 = vsel %vm125, %v122, 0.0
  %v130 = vsel %vm126, %v116, 0.0
  %131 = vrot.lane.b32.xlu0 %v26, 15
  %v132 = vpop.permute.xlu0 %131
  %133 = vrot.lane.b32.xlu0 %v79, 15
  %v134 = vpop.permute.xlu0 %133
  %135 = vrot.lane.b32.xlu0 %v27, 15
  %v136 = vpop.permute.xlu0 %135
  %137 = vrot.lane.b32.xlu0 %v80, 15
  %v138 = vpop.permute.xlu0 %137
  %vm139 = vcmask 121856
  %v140 = vsel %vm139, %v132, %v134
  %v141 = vsel %vm139, %v136, %v138
  %v146 = vsel %vm139, 0.0, %v132
  %v147 = vsel %vm139, 0.0, %v136
  %v148 = vsel %vm75, 1, 0
  %v149 = vsel %vm76, 1, 0
  %vm150 = vcmp.eq.s32.totalorder %v148, 1
  %vm151 = vcmp.eq.s32.totalorder %v149, 1
  %v152 = vsel %vm150, %v146, 0.0
  %v153 = vsel %vm151, %v140, 0.0
  %v154 = vsel %vm150, %v147, 0.0
  %v155 = vsel %vm151, %v141, 0.0
  %156 = vrot.lane.b32.xlu0 %v26, 1
  %v157 = vpop.permute.xlu0 %156
  %158 = vrot.lane.b32.xlu0 %v79, 1
  %v159 = vpop.permute.xlu0 %158
  %160 = vrot.lane.b32.xlu0 %v27, 1
  %v161 = vpop.permute.xlu0 %160
  %162 = vrot.lane.b32.xlu0 %v80, 1
  %v163 = vpop.permute.xlu0 %162
  %vm164 = vcmask 7168
  %v165 = vsel %vm164, %v157, %v159
  %v166 = vsel %vm164, %v161, %v163
  %v171 = vsel %vm164, 0.0, %v157
  %v172 = vsel %vm164, 0.0, %v161
  %v173 = vsel %vm100, %v171, 0.0
  %v174 = vsel %vm101, %v165, 0.0
  %v175 = vsel %vm100, %v172, 0.0
  %v176 = vsel %vm101, %v166, 0.0
  %v179 = vsel %vm125, %v26, 0.0
  %v180 = vsel %vm126, %v79, 0.0
  %v181 = vsel %vm125, %v27, 0.0
  %v182 = vsel %vm126, %v80, 0.0
  %183 = vrot.lane.b32.xlu0 %v26, 127
  %v184 = vpop.permute.xlu0 %183
  %185 = vrot.lane.b32.xlu0 %v79, 127
  %v186 = vpop.permute.xlu0 %185
  %187 = vrot.lane.b32.xlu0 %v27, 127
  %v188 = vpop.permute.xlu0 %187
  %189 = vrot.lane.b32.xlu0 %v80, 127
  %v190 = vpop.permute.xlu0 %189
  %vm191 = vcmask 1039360
  %v192 = vsel %vm191, %v184, %v186
  %v193 = vsel %vm191, %v188, %v190
  %v198 = vsel %vm191, %v186, 0.0
  %v199 = vsel %vm191, %v190, 0.0
  %v200 = vsel %vm150, %v192, 0.0
  %v201 = vsel %vm151, %v198, 0.0
  %v202 = vsel %vm150, %v193, 0.0
  %v203 = vsel %vm151, %v199, 0.0
  %204 = vrot.lane.b32.xlu0 %v26, 113
  %v205 = vpop.permute.xlu0 %204
  %206 = vrot.lane.b32.xlu0 %v79, 113
  %v207 = vpop.permute.xlu0 %206
  %208 = vrot.lane.b32.xlu0 %v27, 113
  %v209 = vpop.permute.xlu0 %208
  %210 = vrot.lane.b32.xlu0 %v80, 113
  %v211 = vpop.permute.xlu0 %210
  %vm212 = vcmask 924672
  %v213 = vsel %vm212, %v205, %v207
  %v214 = vsel %vm212, %v209, %v211
  %v219 = vsel %vm212, %v207, 0.0
  %v220 = vsel %vm212, %v211, 0.0
  %v221 = vsel %vm100, %v213, 0.0
  %v222 = vsel %vm101, %v219, 0.0
  %v223 = vsel %vm100, %v214, 0.0
  %v224 = vsel %vm101, %v220, 0.0
  %225 = vrot.lane.b32.xlu0 %v26, 112
  %v226 = vpop.permute.xlu0 %225
  %227 = vrot.lane.b32.xlu0 %v79, 112
  %v228 = vpop.permute.xlu0 %227
  %229 = vrot.lane.b32.xlu0 %v27, 112
  %v230 = vpop.permute.xlu0 %229
  %231 = vrot.lane.b32.xlu0 %v80, 112
  %v232 = vpop.permute.xlu0 %231
  %vm233 = vcmask 916480
  %v234 = vsel %vm233, %v226, %v228
  %v235 = vsel %vm233, %v230, %v232
  %v240 = vsel %vm233, %v228, 0.0
  %v241 = vsel %vm233, %v232, 0.0
  %v242 = vsel %vm125, %v234, 0.0
  %v243 = vsel %vm126, %v240, 0.0
  %v244 = vsel %vm125, %v235, 0.0
  %v245 = vsel %vm126, %v241, 0.0
  %246 = vrot.lane.b32.xlu0 %v26, 111
  %v247 = vpop.permute.xlu0 %246
  %248 = vrot.lane.b32.xlu0 %v79, 111
  %v249 = vpop.permute.xlu0 %248
  %250 = vrot.lane.b32.xlu0 %v27, 111
  %v251 = vpop.permute.xlu0 %250
  %252 = vrot.lane.b32.xlu0 %v80, 111
  %v253 = vpop.permute.xlu0 %252
  %vm254 = vcmask 908288
  %v255 = vsel %vm254, %v247, %v249
  %v256 = vsel %vm254, %v251, %v253
  %v261 = vsel %vm254, %v249, 0.0
  %v262 = vsel %vm254, %v253, 0.0
  %v263 = vsel %vm150, %v255, 0.0
  %v264 = vsel %vm151, %v261, 0.0
  %v265 = vsel %vm150, %v256, 0.0
  %v266 = vsel %vm151, %v262, 0.0
  %v271 = vrot.slane %v127, 4
  %v272 = vrot.slane %v128, 4
  %v273 = vrot.slane %v129, 4
  %v274 = vrot.slane %v130, 4
  %v283 = vrot.slane %v173, 4
  %v284 = vrot.slane %v174, 4
  %v285 = vrot.slane %v175, 4
  %v286 = vrot.slane %v176, 4
  %v295 = vrot.slane %v200, 4
  %v296 = vrot.slane %v201, 4
  %v297 = vrot.slane %v202, 4
  %v298 = vrot.slane %v203, 4
  %v307 = vrot.slane %v242, 4
  %v308 = vrot.slane %v243, 4
  %v309 = vrot.slane %v244, 4
  %v310 = vrot.slane %v245, 4
  %vm315 = vcmask 1043456
  %v316 = vsel %vm315, %v102, %v271
  %v317 = vsel %vm315, %v103, %v272
  %v318 = vsel %vm315, %v104, %v273
  %v319 = vsel %vm315, %v105, %v274
  %v320 = vsel %vm315, %v152, %v283
  %v321 = vsel %vm315, %v153, %v284
  %v322 = vsel %vm315, %v154, %v285
  %v323 = vsel %vm315, %v155, %v286
  %v324 = vsel %vm315, %v179, %v295
  %v325 = vsel %vm315, %v180, %v296
  %v326 = vsel %vm315, %v181, %v297
  %v327 = vsel %vm315, %v182, %v298
  %v328 = vsel %vm315, %v221, %v307
  %v329 = vsel %vm315, %v222, %v308
  %v330 = vsel %vm315, %v223, %v309
  %v331 = vsel %vm315, %v224, %v310
  %v332 = vld [vmem:[%s1] sm:$0xf]
  %vm333 = vcmask 293888
  %v335 = vsel %vm333, %v332, 0
  %v338 = vsel %vm315, %v263, 0
  %v341 = vsel %vm315, %v264, 0
  %343 = vmatprep.subr.mxu0 %v317
  %344 = vmatpush1.msra.mxu0 %v316
  %345 = vmatprep.subr.mxu0 %v321
  %346 = vmatpush1.msra.mxu0 %v320
  %347 = vmatprep.subr.mxu0 %v325
  %348 = vmatpush1.msra.mxu0 %v324
  %349 = vmatprep.subr.mxu0 %v329
  %350 = vmatpush1.msra.mxu0 %v328
  %351 = vmatprep.subr.mxu0 %v341
  %352 = vmatpush1.msra.mxu0 %v338
  %353 = vmatprep.subr.mxu0 0.0
  %354 = vmatpush1.msra.mxu0 0.0
  %355 = vmatprep.subr.mxu0 0.0
  %356 = vmatpush1.msra.mxu0 0.0
  %357 = vmatprep.subr.mxu0 0.0
  %358 = vmatpush1.msra.mxu0 0.0
  %359 = vmatprep.subr.mxu0 0.0
  %360 = vmatpush1.msra.mxu0 0.0
  %361 = vmatprep.subr.mxu0 0.0
  %362 = vmatpush1.msra.mxu0 0.0
  %363 = vmatprep.subr.mxu0 0.0
  %364 = vmatpush1.msra.mxu0 0.0
  %365 = vmatprep.subr.mxu0 0.0
  %366 = vmatpush1.msra.mxu0 0.0
  %367 = vmatprep.subr.mxu0 0.0
  %368 = vmatpush1.msra.mxu0 0.0
  %369 = vmatprep.subr.mxu0 0.0
  %370 = vmatpush1.msra.mxu0 0.0
  %371 = vmatprep.subr.mxu0 0.0
  %372 = vmatpush1.msra.mxu0 0.0
  %373 = vmatprep.subr.mxu0 0.0
  %374 = vmatpush1.msra.mxu0 0.0
  %375 = vmatprep.subr.mxu0 0.0
  %376 = vmatpush1.msra.mxu0 0.0
  %377 = vmatprep.subr.mxu0 0.0
  %378 = vmatpush1.msra.mxu0 0.0
  %379 = vmatprep.subr.mxu0 0.0
  %380 = vmatpush1.msra.mxu0 0.0
  %381 = vmatprep.subr.mxu0 0.0
  %382 = vmatpush1.msra.mxu0 0.0
  %383 = vmatprep.subr.mxu0 0.0
  %384 = vmatpush1.msra.mxu0 0.0
  %385 = vmatprep.subr.mxu0 0.0
  %386 = vmatpush1.msra.mxu0 0.0
  %387 = vmatprep.subr.mxu0 0.0
  %388 = vmatpush1.msra.mxu0 0.0
  %389 = vmatprep.subr.mxu0 0.0
  %390 = vmatpush1.msra.mxu0 0.0
  %391 = vmatprep.subr.mxu0 0.0
  %392 = vmatpush1.msra.mxu0 0.0
  %393 = vmatprep.subr.mxu0 0.0
  %394 = vmatpush1.msra.mxu0 0.0
  %395 = vmatprep.subr.mxu0 0.0
  %396 = vmatpush1.msra.mxu0 0.0
  %397 = vmatprep.subr.mxu0 0.0
  %398 = vmatpush1.msra.mxu0 0.0
  %399 = vmatprep.subr.mxu0 0.0
  %400 = vmatpush1.msra.mxu0 0.0
  %401 = vmatprep.subr.mxu0 0.0
  %402 = vmatpush1.msra.mxu0 0.0
  %403 = vmatprep.subr.mxu0 0.0
  %404 = vmatpush1.msra.mxu0 0.0
  %405 = vmatprep.subr.mxu0 0.0
  %406 = vmatpush1.msra.mxu0 0.0
  %407 = vmatprep.mubr.f32.mxu0 0.0
  %408 = vmatmul.mubr.f32.gmra.mrb[0].mxu0 %v335
  %v409 = vpop.f32.mrb[0].mxu0
  %v410 = vadd.f32 0.0, %v409
  %v411 = vpop.f32.mrb[0].mxu0
  %v412 = vadd.f32 0.0, %v411
  %413 = vdwg.mxu0
  %v415 = vsel %vm315, %v265, 0
  %v418 = vsel %vm315, %v266, 0
  %420 = vmatprep.subr.mxu0 %v319
  %421 = vmatpush1.msra.mxu0 %v318
  %422 = vmatprep.subr.mxu0 %v323
  %423 = vmatpush1.msra.mxu0 %v322
  %424 = vmatprep.subr.mxu0 %v327
  %425 = vmatpush1.msra.mxu0 %v326
  %426 = vmatprep.subr.mxu0 %v331
  %427 = vmatpush1.msra.mxu0 %v330
  %428 = vmatprep.subr.mxu0 %v418
  %429 = vmatpush1.msra.mxu0 %v415
  %430 = vmatprep.subr.mxu0 0.0
  %431 = vmatpush1.msra.mxu0 0.0
  %432 = vmatprep.subr.mxu0 0.0
  %433 = vmatpush1.msra.mxu0 0.0
  %434 = vmatprep.subr.mxu0 0.0
  %435 = vmatpush1.msra.mxu0 0.0
  %436 = vmatprep.subr.mxu0 0.0
  %437 = vmatpush1.msra.mxu0 0.0
  %438 = vmatprep.subr.mxu0 0.0
  %439 = vmatpush1.msra.mxu0 0.0
  %440 = vmatprep.subr.mxu0 0.0
  %441 = vmatpush1.msra.mxu0 0.0
  %442 = vmatprep.subr.mxu0 0.0
  %443 = vmatpush1.msra.mxu0 0.0
  %444 = vmatprep.subr.mxu0 0.0
  %445 = vmatpush1.msra.mxu0 0.0
  %446 = vmatprep.subr.mxu0 0.0
  %447 = vmatpush1.msra.mxu0 0.0
  %448 = vmatprep.subr.mxu0 0.0
  %449 = vmatpush1.msra.mxu0 0.0
  %450 = vmatprep.subr.mxu0 0.0
  %451 = vmatpush1.msra.mxu0 0.0
  %452 = vmatprep.subr.mxu0 0.0
  %453 = vmatpush1.msra.mxu0 0.0
  %454 = vmatprep.subr.mxu0 0.0
  %455 = vmatpush1.msra.mxu0 0.0
  %456 = vmatprep.subr.mxu0 0.0
  %457 = vmatpush1.msra.mxu0 0.0
  %458 = vmatprep.subr.mxu0 0.0
  %459 = vmatpush1.msra.mxu0 0.0
  %460 = vmatprep.subr.mxu0 0.0
  %461 = vmatpush1.msra.mxu0 0.0
  %462 = vmatprep.subr.mxu0 0.0
  %463 = vmatpush1.msra.mxu0 0.0
  %464 = vmatprep.subr.mxu0 0.0
  %465 = vmatpush1.msra.mxu0 0.0
  %466 = vmatprep.subr.mxu0 0.0
  %467 = vmatpush1.msra.mxu0 0.0
  %468 = vmatprep.subr.mxu0 0.0
  %469 = vmatpush1.msra.mxu0 0.0
  %470 = vmatprep.subr.mxu0 0.0
  %471 = vmatpush1.msra.mxu0 0.0
  %472 = vmatprep.subr.mxu0 0.0
  %473 = vmatpush1.msra.mxu0 0.0
  %474 = vmatprep.subr.mxu0 0.0
  %475 = vmatpush1.msra.mxu0 0.0
  %476 = vmatprep.subr.mxu0 0.0
  %477 = vmatpush1.msra.mxu0 0.0
  %478 = vmatprep.subr.mxu0 0.0
  %479 = vmatpush1.msra.mxu0 0.0
  %480 = vmatprep.subr.mxu0 0.0
  %481 = vmatpush1.msra.mxu0 0.0
  %482 = vmatprep.subr.mxu0 0.0
  %483 = vmatpush1.msra.mxu0 0.0
  %484 = vmatprep.mubr.f32.mxu0 0.0
  %485 = vmatmul.mubr.f32.gmra.mrb[0].mxu0 %v335
  %v486 = vpop.f32.mrb[0].mxu0
  %v487 = vadd.f32 0.0, %v486
  %v488 = vpop.f32.mrb[0].mxu0
  %v489 = vadd.f32 0.0, %v488
  %490 = vdwg.mxu0
  %v491 = vsel %vm315, %v410, 0.0
  %v492 = vsel %vm315, %v412, 0.0
  %v493 = vadd.f32 %v491, %v492
  %v494 = vsel %vm315, %v487, 0.0
  %v495 = vadd.f32 %v493, %v494
  %v496 = vsel %vm315, %v489, 0.0
  %v497 = vadd.f32 %v495, %v496
  %498 = vadd.xlane.f32.xlu0 %v497
  %v499 = vpop.xlane.xlu0 %498
  %v500 = vrcp.pop 512.0
  %v501 = vmul.f32 %v499, %v500
  %v502 = vsub.f32 %v410, %v501
  %v503 = vsub.f32 %v412, %v501
  %v504 = vsub.f32 %v487, %v501
  %v505 = vsub.f32 %v489, %v501
  %v506 = vmul.f32 %v502, %v502
  %v507 = vmul.f32 %v503, %v503
  %v508 = vmul.f32 %v504, %v504
  %v509 = vmul.f32 %v505, %v505
  %v510 = vsel %vm315, %v506, 0.0
  %v511 = vsel %vm315, %v507, 0.0
  %v512 = vadd.f32 %v510, %v511
  %v513 = vsel %vm315, %v508, 0.0
  %v514 = vadd.f32 %v512, %v513
  %v515 = vsel %vm315, %v509, 0.0
  %v516 = vadd.f32 %v514, %v515
  %517 = vadd.xlane.f32.xlu0 %v516
  %v518 = vpop.xlane.xlu0 %517
  %v519 = vmul.f32 %v518, %v500
  %v520 = vadd.f32 %v519, 1e-05
  %v521 = vrsqrt.pop %v520
  %v522 = vmul.f32 %v502, %v521
  %v523 = vmul.f32 %v503, %v521
  %v524 = vmul.f32 %v504, %v521
  %v525 = vmul.f32 %v505, %v521
  %v526 = vld [vmem:[%s3] sm:$0xf]
  %528 = vset.pattern.permute.xlu0 0
  %529 = vperm.xlu0 %528, %v526
  %v530 = vpop.permute.xlu0 %529
  %v532 = vmul.f32 %v522, %v530
  %v533 = vmul.f32 %v523, %v530
  %v534 = vmul.f32 %v524, %v530
  %v535 = vmul.f32 %v525, %v530
  %v536 = vld [vmem:[%s4] sm:$0xf]
  %538 = vset.pattern.permute.xlu0 0
  %539 = vperm.xlu0 %538, %v536
  %v540 = vpop.permute.xlu0 %539
  %v542 = vadd.f32 %v532, %v540
  %v543 = vadd.f32 %v533, %v540
  %v544 = vadd.f32 %v534, %v540
  %v545 = vadd.f32 %v535, %v540
  %v546 = vmax.f32 %v542, 0.0
  %v547 = vmax.f32 %v543, 0.0
  %v548 = vmax.f32 %v544, 0.0
  %v549 = vmax.f32 %v545, 0.0
  %554 = vrot.lane.b32.xlu0 %v546, 17
  %v555 = vpop.permute.xlu0 %554
  %556 = vrot.lane.b32.xlu0 %v547, 17
  %v557 = vpop.permute.xlu0 %556
  %558 = vrot.lane.b32.xlu0 %v548, 17
  %v559 = vpop.permute.xlu0 %558
  %560 = vrot.lane.b32.xlu0 %v549, 17
  %v561 = vpop.permute.xlu0 %560
  %v562 = vsel %vm89, %v555, %v557
  %v563 = vsel %vm89, %v559, %v561
  %v568 = vsel %vm89, 0.0, %v555
  %v569 = vsel %vm89, 0.0, %v559
  %v570 = vsel %vm100, %v568, 0.0
  %v571 = vsel %vm101, %v562, 0.0
  %v572 = vsel %vm100, %v569, 0.0
  %v573 = vsel %vm101, %v563, 0.0
  %574 = vrot.lane.b32.xlu0 %v546, 16
  %v575 = vpop.permute.xlu0 %574
  %576 = vrot.lane.b32.xlu0 %v547, 16
  %v577 = vpop.permute.xlu0 %576
  %578 = vrot.lane.b32.xlu0 %v548, 16
  %v579 = vpop.permute.xlu0 %578
  %580 = vrot.lane.b32.xlu0 %v549, 16
  %v581 = vpop.permute.xlu0 %580
  %v582 = vsel %vm114, %v575, %v577
  %v583 = vsel %vm114, %v579, %v581
  %v588 = vsel %vm114, 0.0, %v575
  %v589 = vsel %vm114, 0.0, %v579
  %v590 = vsel %vm125, %v588, 0.0
  %v591 = vsel %vm126, %v582, 0.0
  %v592 = vsel %vm125, %v589, 0.0
  %v593 = vsel %vm126, %v583, 0.0
  %594 = vrot.lane.b32.xlu0 %v546, 15
  %v595 = vpop.permute.xlu0 %594
  %596 = vrot.lane.b32.xlu0 %v547, 15
  %v597 = vpop.permute.xlu0 %596
  %598 = vrot.lane.b32.xlu0 %v548, 15
  %v599 = vpop.permute.xlu0 %598
  %600 = vrot.lane.b32.xlu0 %v549, 15
  %v601 = vpop.permute.xlu0 %600
  %v602 = vsel %vm139, %v595, %v597
  %v603 = vsel %vm139, %v599, %v601
  %v608 = vsel %vm139, 0.0, %v595
  %v609 = vsel %vm139, 0.0, %v599
  %v610 = vsel %vm150, %v608, 0.0
  %v611 = vsel %vm151, %v602, 0.0
  %v612 = vsel %vm150, %v609, 0.0
  %v613 = vsel %vm151, %v603, 0.0
  %614 = vrot.lane.b32.xlu0 %v546, 1
  %v615 = vpop.permute.xlu0 %614
  %616 = vrot.lane.b32.xlu0 %v547, 1
  %v617 = vpop.permute.xlu0 %616
  %618 = vrot.lane.b32.xlu0 %v548, 1
  %v619 = vpop.permute.xlu0 %618
  %620 = vrot.lane.b32.xlu0 %v549, 1
  %v621 = vpop.permute.xlu0 %620
  %v622 = vsel %vm164, %v615, %v617
  %v623 = vsel %vm164, %v619, %v621
  %v628 = vsel %vm164, 0.0, %v615
  %v629 = vsel %vm164, 0.0, %v619
  %v630 = vsel %vm100, %v628, 0.0
  %v631 = vsel %vm101, %v622, 0.0
  %v632 = vsel %vm100, %v629, 0.0
  %v633 = vsel %vm101, %v623, 0.0
  %v634 = vsel %vm125, %v546, 0.0
  %v635 = vsel %vm126, %v547, 0.0
  %v636 = vsel %vm125, %v548, 0.0
  %v637 = vsel %vm126, %v549, 0.0
  %638 = vrot.lane.b32.xlu0 %v546, 127
  %v639 = vpop.permute.xlu0 %638
  %640 = vrot.lane.b32.xlu0 %v547, 127
  %v641 = vpop.permute.xlu0 %640
  %642 = vrot.lane.b32.xlu0 %v548, 127
  %v643 = vpop.permute.xlu0 %642
  %644 = vrot.lane.b32.xlu0 %v549, 127
  %v645 = vpop.permute.xlu0 %644
  %v646 = vsel %vm191, %v639, %v641
  %v647 = vsel %vm191, %v643, %v645
  %v652 = vsel %vm191, %v641, 0.0
  %v653 = vsel %vm191, %v645, 0.0
  %v654 = vsel %vm150, %v646, 0.0
  %v655 = vsel %vm151, %v652, 0.0
  %v656 = vsel %vm150, %v647, 0.0
  %v657 = vsel %vm151, %v653, 0.0
  %658 = vrot.lane.b32.xlu0 %v546, 113
  %v659 = vpop.permute.xlu0 %658
  %660 = vrot.lane.b32.xlu0 %v547, 113
  %v661 = vpop.permute.xlu0 %660
  %662 = vrot.lane.b32.xlu0 %v548, 113
  %v663 = vpop.permute.xlu0 %662
  %664 = vrot.lane.b32.xlu0 %v549, 113
  %v665 = vpop.permute.xlu0 %664
  %v666 = vsel %vm212, %v659, %v661
  %v667 = vsel %vm212, %v663, %v665
  %v672 = vsel %vm212, %v661, 0.0
  %v673 = vsel %vm212, %v665, 0.0
  %v674 = vsel %vm100, %v666, 0.0
  %v675 = vsel %vm101, %v672, 0.0
  %v676 = vsel %vm100, %v667, 0.0
  %v677 = vsel %vm101, %v673, 0.0
  %678 = vrot.lane.b32.xlu0 %v546, 112
  %v679 = vpop.permute.xlu0 %678
  %680 = vrot.lane.b32.xlu0 %v547, 112
  %v681 = vpop.permute.xlu0 %680
  %682 = vrot.lane.b32.xlu0 %v548, 112
  %v683 = vpop.permute.xlu0 %682
  %684 = vrot.lane.b32.xlu0 %v549, 112
  %v685 = vpop.permute.xlu0 %684
  %v686 = vsel %vm233, %v679, %v681
  %v687 = vsel %vm233, %v683, %v685
  %v692 = vsel %vm233, %v681, 0.0
  %v693 = vsel %vm233, %v685, 0.0
  %v694 = vsel %vm125, %v686, 0.0
  %v695 = vsel %vm126, %v692, 0.0
  %v696 = vsel %vm125, %v687, 0.0
  %v697 = vsel %vm126, %v693, 0.0
  %698 = vrot.lane.b32.xlu0 %v546, 111
  %v699 = vpop.permute.xlu0 %698
  %700 = vrot.lane.b32.xlu0 %v547, 111
  %v701 = vpop.permute.xlu0 %700
  %702 = vrot.lane.b32.xlu0 %v548, 111
  %v703 = vpop.permute.xlu0 %702
  %704 = vrot.lane.b32.xlu0 %v549, 111
  %v705 = vpop.permute.xlu0 %704
  %v706 = vsel %vm254, %v699, %v701
  %v707 = vsel %vm254, %v703, %v705
  %v712 = vsel %vm254, %v701, 0.0
  %v713 = vsel %vm254, %v705, 0.0
  %v714 = vsel %vm150, %v706, 0.0
  %v715 = vsel %vm151, %v712, 0.0
  %v716 = vsel %vm150, %v707, 0.0
  %v717 = vsel %vm151, %v713, 0.0
  %v722 = vrot.slane %v590, 4
  %v723 = vrot.slane %v591, 4
  %v724 = vrot.slane %v592, 4
  %v725 = vrot.slane %v593, 4
  %v734 = vrot.slane %v630, 4
  %v735 = vrot.slane %v631, 4
  %v736 = vrot.slane %v632, 4
  %v737 = vrot.slane %v633, 4
  %v746 = vrot.slane %v654, 4
  %v747 = vrot.slane %v655, 4
  %v748 = vrot.slane %v656, 4
  %v749 = vrot.slane %v657, 4
  %v758 = vrot.slane %v694, 4
  %v759 = vrot.slane %v695, 4
  %v760 = vrot.slane %v696, 4
  %v761 = vrot.slane %v697, 4
  %v766 = vsel %vm315, %v570, %v722
  %v767 = vsel %vm315, %v571, %v723
  %v768 = vsel %vm315, %v572, %v724
  %v769 = vsel %vm315, %v573, %v725
  %v770 = vsel %vm315, %v610, %v734
  %v771 = vsel %vm315, %v611, %v735
  %v772 = vsel %vm315, %v612, %v736
  %v773 = vsel %vm315, %v613, %v737
  %v774 = vsel %vm315, %v634, %v746
  %v775 = vsel %vm315, %v635, %v747
  %v776 = vsel %vm315, %v636, %v748
  %v777 = vsel %vm315, %v637, %v749
  %v778 = vsel %vm315, %v674, %v758
  %v779 = vsel %vm315, %v675, %v759
  %v780 = vsel %vm315, %v676, %v760
  %v781 = vsel %vm315, %v677, %v761
  %v782 = vld [vmem:[%s2] sm:$0xf]
  %v784 = vsel %vm333, %v782, 0
  %v787 = vsel %vm315, %v714, 0
  %v790 = vsel %vm315, %v715, 0
  %792 = vmatprep.subr.mxu0 %v767
  %793 = vmatpush1.msra.mxu0 %v766
  %794 = vmatprep.subr.mxu0 %v771
  %795 = vmatpush1.msra.mxu0 %v770
  %796 = vmatprep.subr.mxu0 %v775
  %797 = vmatpush1.msra.mxu0 %v774
  %798 = vmatprep.subr.mxu0 %v779
  %799 = vmatpush1.msra.mxu0 %v778
  %800 = vmatprep.subr.mxu0 %v790
  %801 = vmatpush1.msra.mxu0 %v787
  %802 = vmatprep.subr.mxu0 0.0
  %803 = vmatpush1.msra.mxu0 0.0
  %804 = vmatprep.subr.mxu0 0.0
  %805 = vmatpush1.msra.mxu0 0.0
  %806 = vmatprep.subr.mxu0 0.0
  %807 = vmatpush1.msra.mxu0 0.0
  %808 = vmatprep.subr.mxu0 0.0
  %809 = vmatpush1.msra.mxu0 0.0
  %810 = vmatprep.subr.mxu0 0.0
  %811 = vmatpush1.msra.mxu0 0.0
  %812 = vmatprep.subr.mxu0 0.0
  %813 = vmatpush1.msra.mxu0 0.0
  %814 = vmatprep.subr.mxu0 0.0
  %815 = vmatpush1.msra.mxu0 0.0
  %816 = vmatprep.subr.mxu0 0.0
  %817 = vmatpush1.msra.mxu0 0.0
  %818 = vmatprep.subr.mxu0 0.0
  %819 = vmatpush1.msra.mxu0 0.0
  %820 = vmatprep.subr.mxu0 0.0
  %821 = vmatpush1.msra.mxu0 0.0
  %822 = vmatprep.subr.mxu0 0.0
  %823 = vmatpush1.msra.mxu0 0.0
  %824 = vmatprep.subr.mxu0 0.0
  %825 = vmatpush1.msra.mxu0 0.0
  %826 = vmatprep.subr.mxu0 0.0
  %827 = vmatpush1.msra.mxu0 0.0
  %828 = vmatprep.subr.mxu0 0.0
  %829 = vmatpush1.msra.mxu0 0.0
  %830 = vmatprep.subr.mxu0 0.0
  %831 = vmatpush1.msra.mxu0 0.0
  %832 = vmatprep.subr.mxu0 0.0
  %833 = vmatpush1.msra.mxu0 0.0
  %834 = vmatprep.subr.mxu0 0.0
  %835 = vmatpush1.msra.mxu0 0.0
  %836 = vmatprep.subr.mxu0 0.0
  %837 = vmatpush1.msra.mxu0 0.0
  %838 = vmatprep.subr.mxu0 0.0
  %839 = vmatpush1.msra.mxu0 0.0
  %840 = vmatprep.subr.mxu0 0.0
  %841 = vmatpush1.msra.mxu0 0.0
  %842 = vmatprep.subr.mxu0 0.0
  %843 = vmatpush1.msra.mxu0 0.0
  %844 = vmatprep.subr.mxu0 0.0
  %845 = vmatpush1.msra.mxu0 0.0
  %846 = vmatprep.subr.mxu0 0.0
  %847 = vmatpush1.msra.mxu0 0.0
  %848 = vmatprep.subr.mxu0 0.0
  %849 = vmatpush1.msra.mxu0 0.0
  %850 = vmatprep.subr.mxu0 0.0
  %851 = vmatpush1.msra.mxu0 0.0
  %852 = vmatprep.subr.mxu0 0.0
  %853 = vmatpush1.msra.mxu0 0.0
  %854 = vmatprep.subr.mxu0 0.0
  %855 = vmatpush1.msra.mxu0 0.0
  %856 = vmatprep.mubr.f32.mxu0 0.0
  %857 = vmatmul.mubr.f32.gmra.mrb[0].mxu0 %v784
  %v858 = vpop.f32.mrb[0].mxu0
  %v859 = vadd.f32 0.0, %v858
  %v860 = vpop.f32.mrb[0].mxu0
  %v861 = vadd.f32 0.0, %v860
  %862 = vdwg.mxu0
  %v864 = vsel %vm315, %v716, 0
  %v867 = vsel %vm315, %v717, 0
  %869 = vmatprep.subr.mxu0 %v769
  %870 = vmatpush1.msra.mxu0 %v768
  %871 = vmatprep.subr.mxu0 %v773
  %872 = vmatpush1.msra.mxu0 %v772
  %873 = vmatprep.subr.mxu0 %v777
  %874 = vmatpush1.msra.mxu0 %v776
  %875 = vmatprep.subr.mxu0 %v781
  %876 = vmatpush1.msra.mxu0 %v780
  %877 = vmatprep.subr.mxu0 %v867
  %878 = vmatpush1.msra.mxu0 %v864
  %879 = vmatprep.subr.mxu0 0.0
  %880 = vmatpush1.msra.mxu0 0.0
  %881 = vmatprep.subr.mxu0 0.0
  %882 = vmatpush1.msra.mxu0 0.0
  %883 = vmatprep.subr.mxu0 0.0
  %884 = vmatpush1.msra.mxu0 0.0
  %885 = vmatprep.subr.mxu0 0.0
  %886 = vmatpush1.msra.mxu0 0.0
  %887 = vmatprep.subr.mxu0 0.0
  %888 = vmatpush1.msra.mxu0 0.0
  %889 = vmatprep.subr.mxu0 0.0
  %890 = vmatpush1.msra.mxu0 0.0
  %891 = vmatprep.subr.mxu0 0.0
  %892 = vmatpush1.msra.mxu0 0.0
  %893 = vmatprep.subr.mxu0 0.0
  %894 = vmatpush1.msra.mxu0 0.0
  %895 = vmatprep.subr.mxu0 0.0
  %896 = vmatpush1.msra.mxu0 0.0
  %897 = vmatprep.subr.mxu0 0.0
  %898 = vmatpush1.msra.mxu0 0.0
  %899 = vmatprep.subr.mxu0 0.0
  %900 = vmatpush1.msra.mxu0 0.0
  %901 = vmatprep.subr.mxu0 0.0
  %902 = vmatpush1.msra.mxu0 0.0
  %903 = vmatprep.subr.mxu0 0.0
  %904 = vmatpush1.msra.mxu0 0.0
  %905 = vmatprep.subr.mxu0 0.0
  %906 = vmatpush1.msra.mxu0 0.0
  %907 = vmatprep.subr.mxu0 0.0
  %908 = vmatpush1.msra.mxu0 0.0
  %909 = vmatprep.subr.mxu0 0.0
  %910 = vmatpush1.msra.mxu0 0.0
  %911 = vmatprep.subr.mxu0 0.0
  %912 = vmatpush1.msra.mxu0 0.0
  %913 = vmatprep.subr.mxu0 0.0
  %914 = vmatpush1.msra.mxu0 0.0
  %915 = vmatprep.subr.mxu0 0.0
  %916 = vmatpush1.msra.mxu0 0.0
  %917 = vmatprep.subr.mxu0 0.0
  %918 = vmatpush1.msra.mxu0 0.0
  %919 = vmatprep.subr.mxu0 0.0
  %920 = vmatpush1.msra.mxu0 0.0
  %921 = vmatprep.subr.mxu0 0.0
  %922 = vmatpush1.msra.mxu0 0.0
  %923 = vmatprep.subr.mxu0 0.0
  %924 = vmatpush1.msra.mxu0 0.0
  %925 = vmatprep.subr.mxu0 0.0
  %926 = vmatpush1.msra.mxu0 0.0
  %927 = vmatprep.subr.mxu0 0.0
  %928 = vmatpush1.msra.mxu0 0.0
  %929 = vmatprep.subr.mxu0 0.0
  %930 = vmatpush1.msra.mxu0 0.0
  %931 = vmatprep.subr.mxu0 0.0
  %932 = vmatpush1.msra.mxu0 0.0
  %933 = vmatprep.mubr.f32.mxu0 0.0
  %934 = vmatmul.mubr.f32.gmra.mrb[0].mxu0 %v784
  %v935 = vpop.f32.mrb[0].mxu0
  %v936 = vadd.f32 0.0, %v935
  %v937 = vpop.f32.mrb[0].mxu0
  %v938 = vadd.f32 0.0, %v937
  %939 = vdwg.mxu0
  %v940 = vsel %vm315, %v859, 0.0
  %v941 = vsel %vm315, %v861, 0.0
  %v942 = vadd.f32 %v940, %v941
  %v943 = vsel %vm315, %v936, 0.0
  %v944 = vadd.f32 %v942, %v943
  %v945 = vsel %vm315, %v938, 0.0
  %v946 = vadd.f32 %v944, %v945
  %947 = vadd.xlane.f32.xlu0 %v946
  %v948 = vpop.xlane.xlu0 %947
  %v949 = vmul.f32 %v948, %v500
  %v950 = vsub.f32 %v859, %v949
  %v951 = vsub.f32 %v861, %v949
  %v952 = vsub.f32 %v936, %v949
  %v953 = vsub.f32 %v938, %v949
  %v954 = vmul.f32 %v950, %v950
  %v955 = vmul.f32 %v951, %v951
  %v956 = vmul.f32 %v952, %v952
  %v957 = vmul.f32 %v953, %v953
  %v958 = vsel %vm315, %v954, 0.0
  %v959 = vsel %vm315, %v955, 0.0
  %v960 = vadd.f32 %v958, %v959
  %v961 = vsel %vm315, %v956, 0.0
  %v962 = vadd.f32 %v960, %v961
  %v963 = vsel %vm315, %v957, 0.0
  %v964 = vadd.f32 %v962, %v963
  %965 = vadd.xlane.f32.xlu0 %v964
  %v966 = vpop.xlane.xlu0 %965
  %v967 = vmul.f32 %v966, %v500
  %v968 = vadd.f32 %v967, 1e-05
  %v969 = vrsqrt.pop %v968
  %v970 = vmul.f32 %v950, %v969
  %v971 = vmul.f32 %v951, %v969
  %v972 = vmul.f32 %v952, %v969
  %v973 = vmul.f32 %v953, %v969
  %v974 = vld [vmem:[%s5] sm:$0xf]
  %976 = vset.pattern.permute.xlu0 0
  %977 = vperm.xlu0 %976, %v974
  %v978 = vpop.permute.xlu0 %977
  %v980 = vmul.f32 %v970, %v978
  %v981 = vmul.f32 %v971, %v978
  %v982 = vmul.f32 %v972, %v978
  %v983 = vmul.f32 %v973, %v978
  %v984 = vld [vmem:[%s6] sm:$0xf]
  %986 = vset.pattern.permute.xlu0 0
  %987 = vperm.xlu0 %986, %v984
  %v988 = vpop.permute.xlu0 %987
  %v990 = vadd.f32 %v980, %v988
  %v991 = vadd.f32 %v981, %v988
  %v992 = vadd.f32 %v982, %v988
  %v993 = vadd.f32 %v983, %v988
  %v994 = vadd.f32 %v990, %v26
  %v995 = vadd.f32 %v991, %v79
  %v996 = vadd.f32 %v992, %v27
  %v997 = vadd.f32 %v993, %v80
  %v998 = vmax.f32 %v994, 0.0
  %v999 = vmax.f32 %v995, 0.0
  %v1000 = vmax.f32 %v996, 0.0
  %v1001 = vmax.f32 %v997, 0.0
  %v1006 = vcombine.low %v998, %v999
  %v1007 = vcombine.low %v1000, %v1001
  %1010 = vst [vmem:[%s7] sm:$0xff] %v1006
  %1011 = vst [vmem:[%s7 + $0x8] sm:$0xff] %v1007
  // Predicated region
  $region30: #{basic_block_forward.1} parent=0 // pred_check
    _
  $region31: #{basic_block_forward.1} parent=0 // pred_check_branch
    %1013 = sbr.rel (0) target = $region33
  $region32: #{basic_block_forward.1} parent=0 // pred_region
    _
  $region33: #{basic_block_forward.1} parent=0 // pred_fallthru
    _
  // Predicated region
  $region34: #{basic_block_forward.1} parent=0 // pred_check
    _
  $region35: #{basic_block_forward.1} parent=0 // pred_check_branch
    %1015 = sbr.rel (0) target = $region37
  $region36: #{basic_block_forward.1} parent=0 // pred_region
    _
  $region37: #{basic_block_forward.1} parent=0 // pred_fallthru
    _

</llo_original>
